<compile_context>
chip_gen: v6e
topology: v6e:2x2x1
jax: 0.10.0
libtpu: 0.0.40
codegen_flags: <defaults>
</compile_context>

<pallas_src>
import jax
import jax.numpy as jnp
from jax.experimental import pallas as pl
from jax.experimental.pallas import tpu as pltpu


def _round_up(x, m):
    return ((x + m - 1) // m) * m


def _is_v7x():
    try:
        kind = jax.devices()[0].device_kind.lower()
        return ("v7" in kind) or ("7x" in kind)
    except Exception:
        return False


def _block_spec(shape, index_map, *, single_buffer=False):
    """BlockSpec; request a single pipeline buffer for grid-invariant blocks."""
    if single_buffer and hasattr(pl, "Buffered"):
        try:
            return pl.BlockSpec(shape, index_map, pipeline_mode=pl.Buffered(1))
        except (TypeError, ValueError):  # older jax without pipeline_mode support
            pass
    return pl.BlockSpec(shape, index_map)


# ---------------------------------------------------------------------------
# Kernels
# ---------------------------------------------------------------------------

def _idclf_cached_kernel(x_ref, w1_ref, b1_ref, w2_ref, b2_ref, out_ref, h_ref):
    """Hidden activation cached in VMEM scratch; class axis is 'arbitrary'."""
    @pl.when(pl.program_id(1) == 0)
    def _():
        # fc1 + folded BatchNorm(eval) + ReLU, f32 accumulation on the MXU.
        h = jnp.dot(x_ref[...].astype(w1_ref.dtype), w1_ref[...],
                    preferred_element_type=jnp.float32)
        h_ref[...] = jnp.maximum(h + b1_ref[...], 0.0).astype(h_ref.dtype)

    logits = jnp.dot(h_ref[...], w2_ref[...],
                     preferred_element_type=jnp.float32) + b2_ref[...]
    out_ref[...] = logits.astype(out_ref.dtype)


def _idclf_recompute_kernel(x_ref, w1_ref, b1_ref, w2_ref, b2_ref, out_ref):
    """Stateless per-tile body; both grid axes can be 'parallel' (v7x megacore)."""
    h = jnp.dot(x_ref[...].astype(w1_ref.dtype), w1_ref[...],
                preferred_element_type=jnp.float32)
    h = jnp.maximum(h + b1_ref[...], 0.0).astype(w2_ref.dtype)
    logits = jnp.dot(h, w2_ref[...],
                     preferred_element_type=jnp.float32) + b2_ref[...]
    out_ref[...] = logits.astype(out_ref.dtype)


# ---------------------------------------------------------------------------
# One-time weight preparation (model init) + light per-call forward
# ---------------------------------------------------------------------------

def prepare_id_classifier(params, *, weight_dtype=jnp.bfloat16, class_parallel=None):
    """Hoisted, one-time weight prep: BN fold, transpose, narrow cast, padding."""
    H, IN = params["fc1_w"].shape
    C = params["fc_w"].shape[0]

    eps = 1e-5  # nn.BatchNorm1d default
    scale = params["bn_gamma"] / jnp.sqrt(params["bn_var"] + eps)     # (H,)
    shift = params["bn_beta"] - params["bn_mean"] * scale             # (H,)

    # Fold BN into fc1:  (x @ fc1_w.T + b1) * scale + shift
    #                  =  x @ (fc1_w.T * scale) + (b1 * scale + shift)
    w1 = (params["fc1_w"].T * scale[None, :]).astype(weight_dtype)    # (IN, H)
    b1 = (params["fc1_b"] * scale + shift).astype(jnp.float32).reshape(1, H)
    w2 = params["fc_w"].T.astype(weight_dtype)                        # (H, C)
    b2 = params["fc_b"].astype(jnp.float32).reshape(1, C)

    LANE = 128
    C128 = _round_up(C, LANE)
    if C128 <= 2048:
        # Few classes: one lane-dense tile is ideal on single-TC chips (v5e/v6e).
        # On v7x force >= 2 class tiles + stateless body so both TCs get work.
        if class_parallel is None:
            class_parallel = _is_v7x() and C128 >= 2 * LANE
        tile_n = _round_up(C128 // 2, LANE) if class_parallel else C128
    else:
        # Many classes: stream 1024-wide class tiles; cache the hidden
        # activation and keep the class axis serial (the fc1 recompute tax
        # would exceed the megacore gain).
        # TODO(synk): benchmark recompute-"parallel" vs cached-"arbitrary" on
        # v7x for very large num_classes at small batch.
        if class_parallel is None:
            class_parallel = False
        tile_n = 1024

    Cp = _round_up(C, tile_n)
    if Cp != C:
        w2 = jnp.pad(w2, ((0, 0), (0, Cp - C)))
        b2 = jnp.pad(b2, ((0, 0), (0, Cp - C)))

    return dict(w1=w1, b1=b1, w2=w2, b2=b2, IN=IN, H=H, C=C, Cp=Cp,
                tile_n=tile_n, class_parallel=bool(class_parallel))


def id_classifier_forward(x, prepped, *, tile_b=None):
    """Pallas forward: x (B, input_size) f32 -> logits (B, num_classes) f32."""
    B, IN = x.shape
    assert IN == prepped["IN"], "input feature size mismatch"
    H, C, Cp = prepped["H"], prepped["C"], prepped["Cp"]
    tile_n = prepped["tile_n"]
    class_parallel = prepped["class_parallel"]
    w1, b1, w2, b2 = prepped["w1"], prepped["b1"], prepped["w2"], prepped["b2"]
    wbytes = jnp.dtype(w1.dtype).itemsize

    # Batch tiling: whole batch when small (block == full dim -> no padding);
    # 256-row tiles otherwise (second "parallel" axis, keeps x VMEM bounded).
    if tile_b is None:
        tile_b = B if B <= 512 else 256
    Bp = _round_up(B, tile_b)
    x_p = x if Bp == B else jnp.pad(x, ((0, Bp - B), (0, 0)))

    nb, nc = Bp // tile_b, Cp // tile_n

    if class_parallel:
        kernel = _idclf_recompute_kernel
        scratch_shapes = []
        dim_sem = ("parallel", "parallel")
    else:
        kernel = _idclf_cached_kernel
        scratch_shapes = [pltpu.VMEM((tile_b, H), w2.dtype)]
        dim_sem = ("parallel", "arbitrary")

    # Explicit VMEM budget: single-buffered grid-invariant blocks, streamed
    # double-buffered class tiles, plus the hidden scratch.
    need = (2 * tile_b * IN * 4          # x tiles (f32)
            + IN * H * wbytes            # w1 (single buffer)
            + H * 4                      # b1 (single buffer)
            + 2 * H * tile_n * wbytes    # w2 tiles
            + 2 * tile_n * 4             # b2 tiles
            + 2 * tile_b * tile_n * 4    # out tiles (f32)
            + tile_b * H * wbytes)       # hidden scratch
    vmem_limit = int(min(128 * 2**20, max(32 * 2**20, 2 * need)))

    fc1_flops = 2 * Bp * IN * H * (nc if class_parallel else 1)
    fc2_flops = 2 * Bp * H * Cp
    bytes_accessed = (Bp * IN * 4 + IN * H * wbytes + H * 4
                      + H * Cp * wbytes + Cp * 4 + Bp * Cp * 4)

    out = pl.pallas_call(
        kernel,
        out_shape=jax.ShapeDtypeStruct((Bp, Cp), jnp.float32),
        grid_spec=pltpu.PrefetchScalarGridSpec(
            num_scalar_prefetch=0,
            grid=(nb, nc),
            in_specs=[
                _block_spec((tile_b, IN), lambda i, j: (i, 0),
                            single_buffer=(nb == 1)),             # x (f32, cast in-kernel)
                _block_spec((IN, H), lambda i, j: (0, 0),
                            single_buffer=True),                  # fc1 weight (pre-T, BN folded)
                _block_spec((1, H), lambda i, j: (0, 0),
                            single_buffer=True),                  # folded fc1/BN bias
                _block_spec((H, tile_n), lambda i, j: (0, j)),    # fc weight class tile (pre-T)
                _block_spec((1, tile_n), lambda i, j: (0, j)),    # fc bias class tile
            ],
            out_specs=pl.BlockSpec((tile_b, tile_n), lambda i, j: (i, j)),
            scratch_shapes=scratch_shapes,
        ),
        compiler_params=pltpu.CompilerParams(
            dimension_semantics=dim_sem,
            vmem_limit_bytes=vmem_limit,
        ),
        cost_estimate=pl.CostEstimate(
            flops=int(fc1_flops + fc2_flops),
            transcendentals=0,
            bytes_accessed=int(bytes_accessed),
        ),
    )(x_p, w1, b1, w2, b2)

    return out[:B, :C]


def reference_forward(x, params):
    eps = 1e-5
    h = x @ params["fc1_w"].T + params["fc1_b"]
    h = (h - params["bn_mean"]) / jnp.sqrt(params["bn_var"] + eps)
    h = h * params["bn_gamma"] + params["bn_beta"]
    h = jnp.maximum(h, 0.0)
    return h @ params["fc_w"].T + params["fc_b"]


if __name__ == "__main__":
    # Small shapes consistent with the module (input_size -> hidden -> num_classes).
    B, IN, H, C = 8, 128, 256, 384

    key = jax.random.PRNGKey(0)
    ks = jax.random.split(key, 9)

    params = {
        "fc1_w": jax.random.normal(ks[0], (H, IN), jnp.float32) * 0.05,
        "fc1_b": jax.random.normal(ks[1], (H,), jnp.float32) * 0.05,
        "bn_gamma": 1.0 + 0.1 * jax.random.normal(ks[2], (H,), jnp.float32),
        "bn_beta": 0.1 * jax.random.normal(ks[3], (H,), jnp.float32),
        "bn_mean": 0.1 * jax.random.normal(ks[4], (H,), jnp.float32),
        "bn_var": jnp.abs(1.0 + 0.1 * jax.random.normal(ks[5], (H,), jnp.float32)),
        "fc_w": jax.random.normal(ks[6], (C, H), jnp.float32) * 0.05,
        "fc_b": jax.random.normal(ks[7], (C,), jnp.float32) * 0.05,
    }

    x = jax.random.normal(ks[8], (B, IN), jnp.float32)

    # One-time weight preparation (model init), then the light per-call forward.
    prepped = prepare_id_classifier(params)
    out = jax.block_until_ready(id_classifier_forward(x, prepped))

    ref = reference_forward(x, params)
    assert out.shape == (B, C)
    # bf16 weights with f32 accumulation: tolerance sized for bf16 rounding.
    assert jnp.allclose(out, ref, atol=3e-2, rtol=3e-2), "mismatch vs JAX reference"

    print("KERNEL_OK")
</pallas_src>

<mosaic_0001>
module attributes {stable_mosaic.version = 11 : i64} {
  func.func @_idclf_cached_kernel(%arg0: i32, %arg1: i32, %arg2: memref<8x128xf32, #tpu.memory_space<vmem>>, %arg3: memref<128x256xbf16, #tpu.memory_space<vmem>>, %arg4: memref<1x256xf32, #tpu.memory_space<vmem>>, %arg5: memref<256x384xbf16, #tpu.memory_space<vmem>>, %arg6: memref<1x384xf32, #tpu.memory_space<vmem>>, %arg7: memref<8x384xf32, #tpu.memory_space<vmem>>, %arg8: memref<8x256xbf16, #tpu.memory_space<vmem>>) attributes {dimension_semantics = [#tpu.dimension_semantics<parallel>, #tpu.dimension_semantics<arbitrary>], iteration_bounds = array<i64: 1, 1>, scalar_prefetch = 0 : i64, scratch_operands = 1 : i64, tpu.core_type = #tpu.core_type<tc>, window_params = [{pipeline_mode = #tpu.pipeline_mode<synchronous>, transform_indices = @transform_0, window_bounds = array<i64: 8, 128>}, {pipeline_mode = #tpu.pipeline_mode<synchronous>, transform_indices = @transform_1, window_bounds = array<i64: 128, 256>}, {pipeline_mode = #tpu.pipeline_mode<synchronous>, transform_indices = @transform_2, window_bounds = array<i64: 1, 256>}, {transform_indices = @transform_3, window_bounds = array<i64: 256, 384>}, {transform_indices = @transform_4, window_bounds = array<i64: 1, 384>}, {transform_indices = @transform_5, window_bounds = array<i64: 8, 384>}]} {
    %c0_i32 = arith.constant 0 : i32
    %0 = arith.cmpi eq, %arg1, %c0_i32 : i32
    %1 = arith.extui %0 : i1 to i32
    %c0_i32_0 = arith.constant 0 : i32
    %2 = arith.cmpi ne, %1, %c0_i32_0 : i32
    scf.if %2 {
      %c0_8 = arith.constant 0 : index
      %c0_9 = arith.constant 0 : index
      %10 = vector.load %arg2[%c0_8, %c0_9] : memref<8x128xf32, #tpu.memory_space<vmem>>, vector<8x128xf32>
      %11 = arith.truncf %10 : vector<8x128xf32> to vector<8x128xbf16>
      %c0_10 = arith.constant 0 : index
      %c0_11 = arith.constant 0 : index
      %12 = vector.load %arg3[%c0_10, %c0_11] : memref<128x256xbf16, #tpu.memory_space<vmem>>, vector<128x256xbf16>
      %cst_12 = arith.constant dense<0.000000e+00> : vector<8x256xf32>
      %13 = tpu.matmul %11, %12, %cst_12 {dimension_numbers = #tpu.dot_dimension_numbers<[1], [0], [0], [1], [0, 0, 1, 1], [], []>} : vector<8x128xbf16>, vector<128x256xbf16>, vector<8x256xf32> -> vector<8x256xf32>
      %c0_13 = arith.constant 0 : index
      %c0_14 = arith.constant 0 : index
      %14 = vector.load %arg4[%c0_13, %c0_14] : memref<1x256xf32, #tpu.memory_space<vmem>>, vector<1x256xf32>
      %15 = vector.broadcast %14 : vector<1x256xf32> to vector<8x256xf32>
      %16 = arith.addf %13, %15 : vector<8x256xf32>
      %cst_15 = arith.constant 0.000000e+00 : f32
      %17 = vector.broadcast %cst_15 : f32 to vector<8x256xf32>
      %18 = arith.maximumf %16, %17 : vector<8x256xf32>
      %19 = arith.truncf %18 : vector<8x256xf32> to vector<8x256xbf16>
      %c0_16 = arith.constant 0 : index
      %c0_17 = arith.constant 0 : index
      %20 = vector.load %arg8[%c0_16, %c0_17] : memref<8x256xbf16, #tpu.memory_space<vmem>>, vector<8x256xbf16>
      tpu.vector_store %arg8[%c0_16, %c0_17], %19 {strides = array<i32>} : memref<8x256xbf16, #tpu.memory_space<vmem>>, vector<8x256xbf16>,
    } else {
    }
    %c0 = arith.constant 0 : index
    %c0_1 = arith.constant 0 : index
    %3 = vector.load %arg8[%c0, %c0_1] : memref<8x256xbf16, #tpu.memory_space<vmem>>, vector<8x256xbf16>
    %c0_2 = arith.constant 0 : index
    %c0_3 = arith.constant 0 : index
    %4 = vector.load %arg5[%c0_2, %c0_3] : memref<256x384xbf16, #tpu.memory_space<vmem>>, vector<256x384xbf16>
    %cst = arith.constant dense<0.000000e+00> : vector<8x384xf32>
    %5 = tpu.matmul %3, %4, %cst {dimension_numbers = #tpu.dot_dimension_numbers<[1], [0], [0], [1], [0, 0, 1, 1], [], []>} : vector<8x256xbf16>, vector<256x384xbf16>, vector<8x384xf32> -> vector<8x384xf32>
    %c0_4 = arith.constant 0 : index
    %c0_5 = arith.constant 0 : index
    %6 = vector.load %arg6[%c0_4, %c0_5] : memref<1x384xf32, #tpu.memory_space<vmem>>, vector<1x384xf32>
    %7 = vector.broadcast %6 : vector<1x384xf32> to vector<8x384xf32>
    %8 = arith.addf %5, %7 : vector<8x384xf32>
    %c0_6 = arith.constant 0 : index
    %c0_7 = arith.constant 0 : index
    %9 = vector.load %arg7[%c0_6, %c0_7] : memref<8x384xf32, #tpu.memory_space<vmem>>, vector<8x384xf32>
    tpu.vector_store %arg7[%c0_6, %c0_7], %8 {strides = array<i32>} : memref<8x384xf32, #tpu.memory_space<vmem>>, vector<8x384xf32>,
    return
  }
  func.func @transform_0(%arg0: i32, %arg1: i32) -> (i32, i32) {
    %c0_i32 = arith.constant 0 : i32
    %c0_i32_0 = arith.constant 0 : i32
    return %arg0, %c0_i32 : i32, i32
  }
  func.func @transform_1(%arg0: i32, %arg1: i32) -> (i32, i32) {
    %c0_i32 = arith.constant 0 : i32
    %c0_i32_0 = arith.constant 0 : i32
    %c0_i32_1 = arith.constant 0 : i32
    return %c0_i32, %c0_i32_0 : i32, i32
  }
  func.func @transform_2(%arg0: i32, %arg1: i32) -> (i32, i32) {
    %c0_i32 = arith.constant 0 : i32
    %c0_i32_0 = arith.constant 0 : i32
    %c0_i32_1 = arith.constant 0 : i32
    return %c0_i32, %c0_i32_0 : i32, i32
  }
  func.func @transform_3(%arg0: i32, %arg1: i32) -> (i32, i32) {
    %c0_i32 = arith.constant 0 : i32
    %c0_i32_0 = arith.constant 0 : i32
    return %c0_i32, %arg1 : i32, i32
  }
  func.func @transform_4(%arg0: i32, %arg1: i32) -> (i32, i32) {
    %c0_i32 = arith.constant 0 : i32
    %c0_i32_0 = arith.constant 0 : i32
    return %c0_i32, %arg1 : i32, i32
  }
  func.func @transform_5(%arg0: i32, %arg1: i32) -> (i32, i32) {
    %c0_i32 = arith.constant 0 : i32
    return %arg0, %arg1 : i32, i32
  }
}

</mosaic_0001>

<llo_original>
// kernel: tpu_custom_call.1
$region0: #{tpu_custom_call.1}
  #allocation0 [shape = 'u32[]', space=smem, size = 0x4, offset = 0x4, fixed_abs, tag = 'smem constant byte address 0x4 - core index']
  #allocation1 [shape = 'u32[144,128]{1,0:T(1,128)}', space=vmem, size = 0x12000, scoped, tag = 'internal scratch']
  #allocation2 [shape = 'bf16[8,256]{1,0:T(8,128)(2,1)}', space=vmem, size = 0x1000, scoped, tag = 'scratch operand']
  %s0 = inlined_call_operand.hbm [shape: f32[8,128], index: 0, kind: input, shape index: {}]
  %s1 = inlined_call_operand.hbm [shape: bf16[128,256], index: 1, kind: input, shape index: {}]
  %s2 = inlined_call_operand.vmem [shape: f32[1,256], index: 2, kind: input, shape index: {}]
  %s3 = inlined_call_operand.hbm [shape: bf16[256,384], index: 3, kind: input, shape index: {}]
  %s4 = inlined_call_operand.vmem [shape: f32[1,384], index: 4, kind: input, shape index: {}]
  %s5 = inlined_call_operand.hbm [shape: f32[8,384], index: 5, kind: output, shape index: {}]
  %s6 = sld [smem:[#allocation0]]
  $region46: #{tpu_custom_call.1} parent=0
    _
  %s8 = ssub.s32 1, %s6
  %s9 = scalar_select 0, %s8, %s6
  $region1: #{tpu_custom_call.1} parent=0
    #allocation3 [shape = 'u8[4096]{0}', space=vmem, size = 0x1000, scoped, tag = 'input window, operand 0, single buffered']
    #allocation4 [shape = 's32[1]{0}', space=sflag, size = 0x4, scoped, tag = 'scoped memory for tpu_custom_call.1']
    #allocation5 [shape = 's32[1]{0}', space=sflag, size = 0x4, scoped, tag = 'scoped memory for tpu_custom_call.1']
    #allocation6 [shape = 'u8[65536]{0}', space=vmem, size = 0x10000, scoped, tag = 'input window, operand 1, single buffered']
    #allocation7 [shape = 's32[1]{0}', space=sflag, size = 0x4, scoped, tag = 'scoped memory for tpu_custom_call.1']
    #allocation8 [shape = 'u8[196608]{0}', space=vmem, size = 0x30000, scoped, tag = 'input window, operand 3, single buffered']
    #allocation9 [shape = 'u8[12288]{0}', space=vmem, size = 0x3000, scoped, tag = 'output window, operand 0, single buffered']
    %10 = vsyncpa [#allocation4], 0
    %11 = vsyncpa [#allocation7], 0
    %12 = vsyncpa [#allocation5], 0
    // Predicated region
    $region2: #{tpu_custom_call.1} parent=1 // pred_check
      _
    $region3: #{tpu_custom_call.1} parent=1 // pred_check_branch
      %14 = sbr.rel (0) target = $region5
    $region4: #{tpu_custom_call.1} parent=1 // pred_region
      %s16 = ssub.s32 128, 128
      %17 = vsyncadd [#allocation4], %s16
      %s19 = sshll.u32 [#allocation3], 4
      %s20 = int_to_ptr.vmem [resolvable:$true] %s19
      %22 = dma.hbm_to_vmem [thread:$0]  %s0, 128, %s20, [#allocation4]
    $region5: #{tpu_custom_call.1} parent=1 // pred_fallthru
      _
    // Predicated region
    $region6: #{tpu_custom_call.1} parent=1 // pred_check
      _
    $region7: #{tpu_custom_call.1} parent=1 // pred_check_branch
      %24 = sbr.rel (0) target = $region9
    $region8: #{tpu_custom_call.1} parent=1 // pred_region
      %s26 = ssub.s32 2048, 2048
      %27 = vsyncadd [#allocation7], %s26
      %s28 = sshll.u32 [#allocation6], 4
      %s29 = int_to_ptr.vmem [resolvable:$true] %s28
      %34 = dma.hbm_to_vmem [thread:$0]  %s1, 2048, %s29, [#allocation7], 128, 128, 8
    $region9: #{tpu_custom_call.1} parent=1 // pred_fallthru
      _
    // Predicated region
    $region10: #{tpu_custom_call.1} parent=1 // pred_check
      _
    $region11: #{tpu_custom_call.1} parent=1 // pred_check_branch
      %36 = sbr.rel (0) target = $region13
    $region12: #{tpu_custom_call.1} parent=1 // pred_region
      _
    $region13: #{tpu_custom_call.1} parent=1 // pred_fallthru
      _
    // Predicated region
    $region14: #{tpu_custom_call.1} parent=1 // pred_check
      _
    $region15: #{tpu_custom_call.1} parent=1 // pred_check_branch
      %38 = sbr.rel (0) target = $region17
    $region16: #{tpu_custom_call.1} parent=1 // pred_region
      %s40 = ssub.s32 6144, 6144
      %41 = vsyncadd [#allocation7], %s40
      %s42 = sshll.u32 [#allocation8], 4
      %s43 = int_to_ptr.vmem [resolvable:$true] %s42
      %48 = dma.hbm_to_vmem [thread:$0]  %s3, 6144, %s43, [#allocation7], 192, 192, 12
    $region17: #{tpu_custom_call.1} parent=1 // pred_fallthru
      _
    // Predicated region
    $region18: #{tpu_custom_call.1} parent=1 // pred_check
      _
    $region19: #{tpu_custom_call.1} parent=1 // pred_check_branch
      %50 = sbr.rel (0) target = $region21
    $region20: #{tpu_custom_call.1} parent=1 // pred_region
      _
    $region21: #{tpu_custom_call.1} parent=1 // pred_fallthru
      _
    // Predicated region
    $region22: #{tpu_custom_call.1} parent=1 // pred_check
      _
    $region23: #{tpu_custom_call.1} parent=1 // pred_check_branch
      %52 = sbr.rel (0) target = $region25
    $region24: #{tpu_custom_call.1} parent=1 // pred_region
      %53 = dma.done [#allocation4], 128
    $region25: #{tpu_custom_call.1} parent=1 // pred_fallthru
      _
    // Predicated region
    $region26: #{tpu_custom_call.1} parent=1 // pred_check
      _
    $region27: #{tpu_custom_call.1} parent=1 // pred_check_branch
      %55 = sbr.rel (0) target = $region29
    $region28: #{tpu_custom_call.1} parent=1 // pred_region
      %56 = dma.done [#allocation7], 2048
    $region29: #{tpu_custom_call.1} parent=1 // pred_fallthru
      _
    // Predicated region
    $region30: #{tpu_custom_call.1} parent=1 // pred_check
      _
    $region31: #{tpu_custom_call.1} parent=1 // pred_check_branch
      %58 = sbr.rel (0) target = $region33
    $region32: #{tpu_custom_call.1} parent=1 // pred_region
      %59 = dma.done [#allocation7], 6144
    $region33: #{tpu_custom_call.1} parent=1 // pred_fallthru
      _
    %p61 = scmp.eq.s32.totalorder 0, 0
    // Predicated region
    $region34: #{tpu_custom_call.1} parent=1 // pred_check
      %p62 = pneg %p61
    $region35: #{tpu_custom_call.1} parent=1 // pred_check_branch
      %64 = sbr.rel (%p62) target = $region37
    $region36: #{tpu_custom_call.1} parent=1 // pred_region
      %v65 = vld [vmem:[#allocation3] sm:$0xff]
      %v66 = vpack.c.bf16 %v65, %v65
      %v67 = vld [vmem:[#allocation6] sm:$0xff]
      %v68 = vld [vmem:[#allocation6 + $0x8] sm:$0xff]
      %v69 = vld [vmem:[#allocation6 + $0x10] sm:$0xff]
      %v70 = vld [vmem:[#allocation6 + $0x18] sm:$0xff]
      %v71 = vld [vmem:[#allocation6 + $0x20] sm:$0xff]
      %v72 = vld [vmem:[#allocation6 + $0x28] sm:$0xff]
      %v73 = vld [vmem:[#allocation6 + $0x30] sm:$0xff]
      %v74 = vld [vmem:[#allocation6 + $0x38] sm:$0xff]
      %v75 = vld [vmem:[#allocation6 + $0x40] sm:$0xff]
      %v76 = vld [vmem:[#allocation6 + $0x48] sm:$0xff]
      %v77 = vld [vmem:[#allocation6 + $0x50] sm:$0xff]
      %v78 = vld [vmem:[#allocation6 + $0x58] sm:$0xff]
      %v79 = vld [vmem:[#allocation6 + $0x60] sm:$0xff]
      %v80 = vld [vmem:[#allocation6 + $0x68] sm:$0xff]
      %v81 = vld [vmem:[#allocation6 + $0x70] sm:$0xff]
      %v82 = vld [vmem:[#allocation6 + $0x78] sm:$0xff]
      %v83 = vld [vmem:[%s2] sm:$0x3]
      %v85 = vlaneseq
      %v86 = vshrl.u32 %v85, 7
      %v87 = vsub.s32 0, %v86
      %v88 = vrot.slane %v83, %v87
      %v89 = vlaneseq
      %v90 = vshrl.u32 %v89, 7
      %v91 = vsub.s32 1, %v90
      %v92 = vrot.slane %v83, %v91
      %v111 = vunpack.c.l.b16 %v67
      %v112 = vunpack.c.h.b16 %v67
      %v113 = vunpack.c.l.b16 %v68
      %v114 = vunpack.c.h.b16 %v68
      %v115 = vunpack.c.l.b16 %v69
      %v116 = vunpack.c.h.b16 %v69
      %v117 = vunpack.c.l.b16 %v70
      %v118 = vunpack.c.h.b16 %v70
      %v119 = vunpack.c.l.b16 %v71
      %v120 = vunpack.c.h.b16 %v71
      %v121 = vunpack.c.l.b16 %v72
      %v122 = vunpack.c.h.b16 %v72
      %v123 = vunpack.c.l.b16 %v73
      %v124 = vunpack.c.h.b16 %v73
      %v125 = vunpack.c.l.b16 %v74
      %v126 = vunpack.c.h.b16 %v74
      %v127 = vunpack.c.l.b16 %v75
      %v128 = vunpack.c.h.b16 %v75
      %v129 = vunpack.c.l.b16 %v76
      %v130 = vunpack.c.h.b16 %v76
      %v131 = vunpack.c.l.b16 %v77
      %v132 = vunpack.c.h.b16 %v77
      %v133 = vunpack.c.l.b16 %v78
      %v134 = vunpack.c.h.b16 %v78
      %v135 = vunpack.c.l.b16 %v79
      %v136 = vunpack.c.h.b16 %v79
      %v137 = vunpack.c.l.b16 %v80
      %v138 = vunpack.c.h.b16 %v80
      %v139 = vunpack.c.l.b16 %v81
      %v140 = vunpack.c.h.b16 %v81
      %v141 = vunpack.c.l.b16 %v82
      %v142 = vunpack.c.h.b16 %v82
      %v143 = vpack.c.b16 %v113, %v111
      %v144 = vpack.c.b16 %v114, %v112
      %v145 = vpack.c.b16 %v117, %v115
      %v146 = vpack.c.b16 %v118, %v116
      %v147 = vpack.c.b16 %v121, %v119
      %v148 = vpack.c.b16 %v122, %v120
      %v149 = vpack.c.b16 %v125, %v123
      %v150 = vpack.c.b16 %v126, %v124
      %v151 = vpack.c.b16 %v129, %v127
      %v152 = vpack.c.b16 %v130, %v128
      %v153 = vpack.c.b16 %v133, %v131
      %v154 = vpack.c.b16 %v134, %v132
      %v155 = vpack.c.b16 %v137, %v135
      %v156 = vpack.c.b16 %v138, %v136
      %v157 = vpack.c.b16 %v141, %v139
      %v158 = vpack.c.b16 %v142, %v140
      %175 = vmatprep.subr.bf16.mxu0 %v158
      %176 = vmatpush1.bf16.msra.mxu0 %v157
      %177 = vmatprep.subr.bf16.mxu0 %v156
      %178 = vmatpush1.bf16.msra.mxu0 %v155
      %179 = vmatprep.subr.bf16.mxu0 %v154
      %180 = vmatpush1.bf16.msra.mxu0 %v153
      %181 = vmatprep.subr.bf16.mxu0 %v152
      %182 = vmatpush1.bf16.msra.mxu0 %v151
      %183 = vmatprep.subr.bf16.mxu0 %v150
      %184 = vmatpush1.bf16.msra.mxu0 %v149
      %185 = vmatprep.subr.bf16.mxu0 %v148
      %186 = vmatpush1.bf16.msra.mxu0 %v147
      %187 = vmatprep.subr.bf16.mxu0 %v146
      %188 = vmatpush1.bf16.msra.mxu0 %v145
      %189 = vmatprep.subr.bf16.mxu0 %v144
      %190 = vmatpush1.bf16.msra.mxu0 %v143
      %191 = vmatprep.subr.bf16.mxu0 0
      %192 = vmatpush2.bf16.msra.mxu0 0
      %193 = vmatprep.subr.bf16.mxu0 0
      %194 = vmatpush2.bf16.msra.mxu0 0
      %195 = vmatprep.subr.bf16.mxu0 0
      %196 = vmatpush2.bf16.msra.mxu0 0
      %197 = vmatprep.subr.bf16.mxu0 0
      %198 = vmatpush2.bf16.msra.mxu0 0
      %199 = vmatprep.subr.bf16.mxu0 0
      %200 = vmatpush2.bf16.msra.mxu0 0
      %201 = vmatprep.subr.bf16.mxu0 0
      %202 = vmatpush2.bf16.msra.mxu0 0
      %203 = vmatprep.subr.bf16.mxu0 0
      %204 = vmatpush2.bf16.msra.mxu0 0
      %205 = vmatprep.subr.bf16.mxu0 0
      %206 = vmatpush2.bf16.msra.mxu0 0
      %207 = vmatprep.mubr.bf16.mxu0 0
      %208 = vmatmul.mubr.bf16.gmra.mxu0 %v66
      %v209 = vpop.f32.mrf.mxu0
      %v210 = vadd.f32 %v88, %v209
      %v211 = vpop.f32.mrf.mxu0
      %v212 = vadd.f32 %v92, %v211
      %v213 = vpop.f32.mrf.mxu0
      %v214 = vpop.f32.mrf.mxu0
      %215 = vdwg.mxu0
      %v216 = vmax.f32 %v210, 0.0
      %v217 = vmax.f32 %v212, 0.0
      %v218 = vpack.c.bf16 %v216, %v216
      %v219 = vpack.c.bf16 %v217, %v217
      %v222 = vunpack.c.l.b16 %v218
      %v223 = vunpack.c.l.b16 %v219
      %v224 = vpack.c.b16 %v223, %v222
      %226 = vst [vmem:[#allocation2] sm:$0xff] %v224
    $region37: #{tpu_custom_call.1} parent=1 // pred_fallthru
      _
    %v227 = vld [vmem:[#allocation2] sm:$0xff]
    %v228 = vld [vmem:[#allocation8] sm:$0xff]
    %v229 = vld [vmem:[#allocation8 + $0x8] sm:$0xf]
    %v230 = vld [vmem:[#allocation8 + $0xc] sm:$0xff]
    %v231 = vld [vmem:[#allocation8 + $0x14] sm:$0xf]
    %v232 = vld [vmem:[#allocation8 + $0x18] sm:$0xff]
    %v233 = vld [vmem:[#allocation8 + $0x20] sm:$0xf]
    %v234 = vld [vmem:[#allocation8 + $0x24] sm:$0xff]
    %v235 = vld [vmem:[#allocation8 + $0x2c] sm:$0xf]
    %v236 = vld [vmem:[#allocation8 + $0x30] sm:$0xff]
    %v237 = vld [vmem:[#allocation8 + $0x38] sm:$0xf]
    %v238 = vld [vmem:[#allocation8 + $0x3c] sm:$0xff]
    %v239 = vld [vmem:[#allocation8 + $0x44] sm:$0xf]
    %v240 = vld [vmem:[#allocation8 + $0x48] sm:$0xff]
    %v241 = vld [vmem:[#allocation8 + $0x50] sm:$0xf]
    %v242 = vld [vmem:[#allocation8 + $0x54] sm:$0xff]
    %v243 = vld [vmem:[#allocation8 + $0x5c] sm:$0xf]
    %v244 = vld [vmem:[#allocation8 + $0x60] sm:$0xff]
    %v245 = vld [vmem:[#allocation8 + $0x68] sm:$0xf]
    %v246 = vld [vmem:[#allocation8 + $0x6c] sm:$0xff]
    %v247 = vld [vmem:[#allocation8 + $0x74] sm:$0xf]
    %v248 = vld [vmem:[#allocation8 + $0x78] sm:$0xff]
    %v249 = vld [vmem:[#allocation8 + $0x80] sm:$0xf]
    %v250 = vld [vmem:[#allocation8 + $0x84] sm:$0xff]
    %v251 = vld [vmem:[#allocation8 + $0x8c] sm:$0xf]
    %v252 = vld [vmem:[#allocation8 + $0x90] sm:$0xff]
    %v253 = vld [vmem:[#allocation8 + $0x98] sm:$0xf]
    %v254 = vld [vmem:[#allocation8 + $0x9c] sm:$0xff]
    %v255 = vld [vmem:[#allocation8 + $0xa4] sm:$0xf]
    %v256 = vld [vmem:[#allocation8 + $0xa8] sm:$0xff]
    %v257 = vld [vmem:[#allocation8 + $0xb0] sm:$0xf]
    %v258 = vld [vmem:[#allocation8 + $0xb4] sm:$0xff]
    %v259 = vld [vmem:[#allocation8 + $0xbc] sm:$0xf]
    %v260 = vld [vmem:[#allocation8 + $0xc0] sm:$0xff]
    %v261 = vld [vmem:[#allocation8 + $0xc8] sm:$0xf]
    %v262 = vld [vmem:[#allocation8 + $0xcc] sm:$0xff]
    %v263 = vld [vmem:[#allocation8 + $0xd4] sm:$0xf]
    %v264 = vld [vmem:[#allocation8 + $0xd8] sm:$0xff]
    %v265 = vld [vmem:[#allocation8 + $0xe0] sm:$0xf]
    %v266 = vld [vmem:[#allocation8 + $0xe4] sm:$0xff]
    %v267 = vld [vmem:[#allocation8 + $0xec] sm:$0xf]
    %v268 = vld [vmem:[#allocation8 + $0xf0] sm:$0xff]
    %v269 = vld [vmem:[#allocation8 + $0xf8] sm:$0xf]
    %v270 = vld [vmem:[#allocation8 + $0xfc] sm:$0xff]
    %v271 = vld [vmem:[#allocation8 + $0x104] sm:$0xf]
    %v272 = vld [vmem:[#allocation8 + $0x108] sm:$0xff]
    %v273 = vld [vmem:[#allocation8 + $0x110] sm:$0xf]
    %v274 = vld [vmem:[#allocation8 + $0x114] sm:$0xff]
    %v275 = vld [vmem:[#allocation8 + $0x11c] sm:$0xf]
    %v276 = vld [vmem:[#allocation8 + $0x120] sm:$0xff]
    %v277 = vld [vmem:[#allocation8 + $0x128] sm:$0xf]
    %v278 = vld [vmem:[#allocation8 + $0x12c] sm:$0xff]
    %v279 = vld [vmem:[#allocation8 + $0x134] sm:$0xf]
    %v280 = vld [vmem:[#allocation8 + $0x138] sm:$0xff]
    %v281 = vld [vmem:[#allocation8 + $0x140] sm:$0xf]
    %v282 = vld [vmem:[#allocation8 + $0x144] sm:$0xff]
    %v283 = vld [vmem:[#allocation8 + $0x14c] sm:$0xf]
    %v284 = vld [vmem:[#allocation8 + $0x150] sm:$0xff]
    %v285 = vld [vmem:[#allocation8 + $0x158] sm:$0xf]
    %v286 = vld [vmem:[#allocation8 + $0x15c] sm:$0xff]
    %v287 = vld [vmem:[#allocation8 + $0x164] sm:$0xf]
    %v288 = vld [vmem:[#allocation8 + $0x168] sm:$0xff]
    %v289 = vld [vmem:[#allocation8 + $0x170] sm:$0xf]
    %v290 = vld [vmem:[#allocation8 + $0x174] sm:$0xff]
    %v291 = vld [vmem:[#allocation8 + $0x17c] sm:$0xf]
    %v292 = vld [vmem:[%s4] sm:$0x7]
    %v294 = vlaneseq
    %v295 = vshrl.u32 %v294, 7
    %v296 = vsub.s32 0, %v295
    %v297 = vrot.slane %v292, %v296
    %v298 = vlaneseq
    %v299 = vshrl.u32 %v298, 7
    %v300 = vsub.s32 1, %v299
    %v301 = vrot.slane %v292, %v300
    %v302 = vlaneseq
    %v303 = vshrl.u32 %v302, 7
    %v304 = vsub.s32 2, %v303
    %v305 = vrot.slane %v292, %v304
    %v310 = vunpack.c.l.b16 %v227
    %v311 = vunpack.c.h.b16 %v227
    %v312 = vpack.c.b16 %v310, %v310
    %v313 = vpack.c.b16 %v311, %v311
    %v380 = vunpack.c.l.b16 %v228
    %v381 = vunpack.c.h.b16 %v228
    %v382 = vunpack.c.l.b16 %v229
    %v383 = vunpack.c.l.b16 %v230
    %v384 = vunpack.c.h.b16 %v230
    %v385 = vunpack.c.l.b16 %v231
    %v386 = vunpack.c.l.b16 %v232
    %v387 = vunpack.c.h.b16 %v232
    %v388 = vunpack.c.l.b16 %v233
    %v389 = vunpack.c.l.b16 %v234
    %v390 = vunpack.c.h.b16 %v234
    %v391 = vunpack.c.l.b16 %v235
    %v392 = vunpack.c.l.b16 %v236
    %v393 = vunpack.c.h.b16 %v236
    %v394 = vunpack.c.l.b16 %v237
    %v395 = vunpack.c.l.b16 %v238
    %v396 = vunpack.c.h.b16 %v238
    %v397 = vunpack.c.l.b16 %v239
    %v398 = vunpack.c.l.b16 %v240
    %v399 = vunpack.c.h.b16 %v240
    %v400 = vunpack.c.l.b16 %v241
    %v401 = vunpack.c.l.b16 %v242
    %v402 = vunpack.c.h.b16 %v242
    %v403 = vunpack.c.l.b16 %v243
    %v404 = vunpack.c.l.b16 %v244
    %v405 = vunpack.c.h.b16 %v244
    %v406 = vunpack.c.l.b16 %v245
    %v407 = vunpack.c.l.b16 %v246
    %v408 = vunpack.c.h.b16 %v246
    %v409 = vunpack.c.l.b16 %v247
    %v410 = vunpack.c.l.b16 %v248
    %v411 = vunpack.c.h.b16 %v248
    %v412 = vunpack.c.l.b16 %v249
    %v413 = vunpack.c.l.b16 %v250
    %v414 = vunpack.c.h.b16 %v250
    %v415 = vunpack.c.l.b16 %v251
    %v416 = vunpack.c.l.b16 %v252
    %v417 = vunpack.c.h.b16 %v252
    %v418 = vunpack.c.l.b16 %v253
    %v419 = vunpack.c.l.b16 %v254
    %v420 = vunpack.c.h.b16 %v254
    %v421 = vunpack.c.l.b16 %v255
    %v422 = vunpack.c.l.b16 %v256
    %v423 = vunpack.c.h.b16 %v256
    %v424 = vunpack.c.l.b16 %v257
    %v425 = vunpack.c.l.b16 %v258
    %v426 = vunpack.c.h.b16 %v258
    %v427 = vunpack.c.l.b16 %v259
    %v428 = vunpack.c.l.b16 %v260
    %v429 = vunpack.c.h.b16 %v260
    %v430 = vunpack.c.l.b16 %v261
    %v431 = vunpack.c.l.b16 %v262
    %v432 = vunpack.c.h.b16 %v262
    %v433 = vunpack.c.l.b16 %v263
    %v434 = vunpack.c.l.b16 %v264
    %v435 = vunpack.c.h.b16 %v264
    %v436 = vunpack.c.l.b16 %v265
    %v437 = vunpack.c.l.b16 %v266
    %v438 = vunpack.c.h.b16 %v266
    %v439 = vunpack.c.l.b16 %v267
    %v440 = vunpack.c.l.b16 %v268
    %v441 = vunpack.c.h.b16 %v268
    %v442 = vunpack.c.l.b16 %v269
    %v443 = vunpack.c.l.b16 %v270
    %v444 = vunpack.c.h.b16 %v270
    %v445 = vunpack.c.l.b16 %v271
    %v446 = vunpack.c.l.b16 %v272
    %v447 = vunpack.c.h.b16 %v272
    %v448 = vunpack.c.l.b16 %v273
    %v449 = vunpack.c.l.b16 %v274
    %v450 = vunpack.c.h.b16 %v274
    %v451 = vunpack.c.l.b16 %v275
    %v452 = vunpack.c.l.b16 %v276
    %v453 = vunpack.c.h.b16 %v276
    %v454 = vunpack.c.l.b16 %v277
    %v455 = vunpack.c.l.b16 %v278
    %v456 = vunpack.c.h.b16 %v278
    %v457 = vunpack.c.l.b16 %v279
    %v458 = vunpack.c.l.b16 %v280
    %v459 = vunpack.c.h.b16 %v280
    %v460 = vunpack.c.l.b16 %v281
    %v461 = vunpack.c.l.b16 %v282
    %v462 = vunpack.c.h.b16 %v282
    %v463 = vunpack.c.l.b16 %v283
    %v464 = vunpack.c.l.b16 %v284
    %v465 = vunpack.c.h.b16 %v284
    %v466 = vunpack.c.l.b16 %v285
    %v467 = vunpack.c.l.b16 %v286
    %v468 = vunpack.c.h.b16 %v286
    %v469 = vunpack.c.l.b16 %v287
    %v470 = vunpack.c.l.b16 %v288
    %v471 = vunpack.c.h.b16 %v288
    %v472 = vunpack.c.l.b16 %v289
    %v473 = vunpack.c.l.b16 %v290
    %v474 = vunpack.c.h.b16 %v290
    %v475 = vunpack.c.l.b16 %v291
    %v476 = vpack.c.b16 %v383, %v380
    %v477 = vpack.c.b16 %v384, %v381
    %v478 = vpack.c.b16 %v385, %v382
    %v479 = vpack.c.b16 %v389, %v386
    %v480 = vpack.c.b16 %v390, %v387
    %v481 = vpack.c.b16 %v391, %v388
    %v482 = vpack.c.b16 %v395, %v392
    %v483 = vpack.c.b16 %v396, %v393
    %v484 = vpack.c.b16 %v397, %v394
    %v485 = vpack.c.b16 %v401, %v398
    %v486 = vpack.c.b16 %v402, %v399
    %v487 = vpack.c.b16 %v403, %v400
    %v488 = vpack.c.b16 %v407, %v404
    %v489 = vpack.c.b16 %v408, %v405
    %v490 = vpack.c.b16 %v409, %v406
    %v491 = vpack.c.b16 %v413, %v410
    %v492 = vpack.c.b16 %v414, %v411
    %v493 = vpack.c.b16 %v415, %v412
    %v494 = vpack.c.b16 %v419, %v416
    %v495 = vpack.c.b16 %v420, %v417
    %v496 = vpack.c.b16 %v421, %v418
    %v497 = vpack.c.b16 %v425, %v422
    %v498 = vpack.c.b16 %v426, %v423
    %v499 = vpack.c.b16 %v427, %v424
    %v500 = vpack.c.b16 %v431, %v428
    %v501 = vpack.c.b16 %v432, %v429
    %v502 = vpack.c.b16 %v433, %v430
    %v503 = vpack.c.b16 %v437, %v434
    %v504 = vpack.c.b16 %v438, %v435
    %v505 = vpack.c.b16 %v439, %v436
    %v506 = vpack.c.b16 %v443, %v440
    %v507 = vpack.c.b16 %v444, %v441
    %v508 = vpack.c.b16 %v445, %v442
    %v509 = vpack.c.b16 %v449, %v446
    %v510 = vpack.c.b16 %v450, %v447
    %v511 = vpack.c.b16 %v451, %v448
    %v512 = vpack.c.b16 %v455, %v452
    %v513 = vpack.c.b16 %v456, %v453
    %v514 = vpack.c.b16 %v457, %v454
    %v515 = vpack.c.b16 %v461, %v458
    %v516 = vpack.c.b16 %v462, %v459
    %v517 = vpack.c.b16 %v463, %v460
    %v518 = vpack.c.b16 %v467, %v464
    %v519 = vpack.c.b16 %v468, %v465
    %v520 = vpack.c.b16 %v469, %v466
    %v521 = vpack.c.b16 %v473, %v470
    %v522 = vpack.c.b16 %v474, %v471
    %v523 = vpack.c.b16 %v475, %v472
    %572 = vmatprep.subr.bf16.mxu0 %v498
    %573 = vmatpush1.bf16.msra.mxu0 %v497
    %574 = vmatprep.subr.bf16.mxu0 %v495
    %575 = vmatpush1.bf16.msra.mxu0 %v494
    %576 = vmatprep.subr.bf16.mxu0 %v492
    %577 = vmatpush1.bf16.msra.mxu0 %v491
    %578 = vmatprep.subr.bf16.mxu0 %v489
    %579 = vmatpush1.bf16.msra.mxu0 %v488
    %580 = vmatprep.subr.bf16.mxu0 %v486
    %581 = vmatpush1.bf16.msra.mxu0 %v485
    %582 = vmatprep.subr.bf16.mxu0 %v483
    %583 = vmatpush1.bf16.msra.mxu0 %v482
    %584 = vmatprep.subr.bf16.mxu0 %v480
    %585 = vmatpush1.bf16.msra.mxu0 %v479
    %586 = vmatprep.subr.bf16.mxu0 %v477
    %587 = vmatpush1.bf16.msra.mxu0 %v476
    %588 = vmatprep.subr.bf16.mxu0 %v522
    %589 = vmatpush2.bf16.msra.mxu0 %v521
    %590 = vmatprep.subr.bf16.mxu0 %v519
    %591 = vmatpush2.bf16.msra.mxu0 %v518
    %592 = vmatprep.subr.bf16.mxu0 %v516
    %593 = vmatpush2.bf16.msra.mxu0 %v515
    %594 = vmatprep.subr.bf16.mxu0 %v513
    %595 = vmatpush2.bf16.msra.mxu0 %v512
    %596 = vmatprep.subr.bf16.mxu0 %v510
    %597 = vmatpush2.bf16.msra.mxu0 %v509
    %598 = vmatprep.subr.bf16.mxu0 %v507
    %599 = vmatpush2.bf16.msra.mxu0 %v506
    %600 = vmatprep.subr.bf16.mxu0 %v504
    %601 = vmatpush2.bf16.msra.mxu0 %v503
    %602 = vmatprep.subr.bf16.mxu0 %v501
    %603 = vmatpush2.bf16.msra.mxu0 %v500
    %604 = vmatprep.mubr.bf16.mxu0 %v313
    %605 = vmatmul.mubr.bf16.gmra.mxu0 %v312
    %v606 = vpop.f32.mrf.mxu0
    %v607 = vadd.f32 %v297, %v606
    %v608 = vpop.f32.mrf.mxu0
    %v609 = vadd.f32 %v301, %v608
    %v610 = vpop.f32.mrf.mxu0
    %v611 = vpop.f32.mrf.mxu0
    %612 = vdwg.mxu0
    %613 = vmatprep.subr.bf16.mxu0 0
    %614 = vmatpush1.bf16.msra.mxu0 %v499
    %615 = vmatprep.subr.bf16.mxu0 0
    %616 = vmatpush1.bf16.msra.mxu0 %v496
    %617 = vmatprep.subr.bf16.mxu0 0
    %618 = vmatpush1.bf16.msra.mxu0 %v493
    %619 = vmatprep.subr.bf16.mxu0 0
    %620 = vmatpush1.bf16.msra.mxu0 %v490
    %621 = vmatprep.subr.bf16.mxu0 0
    %622 = vmatpush1.bf16.msra.mxu0 %v487
    %623 = vmatprep.subr.bf16.mxu0 0
    %624 = vmatpush1.bf16.msra.mxu0 %v484
    %625 = vmatprep.subr.bf16.mxu0 0
    %626 = vmatpush1.bf16.msra.mxu0 %v481
    %627 = vmatprep.subr.bf16.mxu0 0
    %628 = vmatpush1.bf16.msra.mxu0 %v478
    %629 = vmatprep.subr.bf16.mxu0 0
    %630 = vmatpush2.bf16.msra.mxu0 %v523
    %631 = vmatprep.subr.bf16.mxu0 0
    %632 = vmatpush2.bf16.msra.mxu0 %v520
    %633 = vmatprep.subr.bf16.mxu0 0
    %634 = vmatpush2.bf16.msra.mxu0 %v517
    %635 = vmatprep.subr.bf16.mxu0 0
    %636 = vmatpush2.bf16.msra.mxu0 %v514
    %637 = vmatprep.subr.bf16.mxu0 0
    %638 = vmatpush2.bf16.msra.mxu0 %v511
    %639 = vmatprep.subr.bf16.mxu0 0
    %640 = vmatpush2.bf16.msra.mxu0 %v508
    %641 = vmatprep.subr.bf16.mxu0 0
    %642 = vmatpush2.bf16.msra.mxu0 %v505
    %643 = vmatprep.subr.bf16.mxu0 0
    %644 = vmatpush2.bf16.msra.mxu0 %v502
    %645 = vmatprep.mubr.bf16.mxu0 %v313
    %646 = vmatmul.mubr.bf16.gmra.mxu0 %v312
    %v647 = vpop.f32.mrf.mxu0
    %v648 = vadd.f32 %v305, %v647
    %v649 = vpop.f32.mrf.mxu0
    %v650 = vpop.f32.mrf.mxu0
    %v651 = vpop.f32.mrf.mxu0
    %652 = vdwg.mxu0
    %653 = vst [vmem:[#allocation9] sm:$0xff] %v607
    %654 = vst [vmem:[#allocation9 + $0x8] sm:$0xff] %v609
    %655 = vst [vmem:[#allocation9 + $0x10] sm:$0xff] %v648
    // Predicated region
    $region38: #{tpu_custom_call.1} parent=1 // pred_check
      _
    $region39: #{tpu_custom_call.1} parent=1 // pred_check_branch
      %657 = sbr.rel (0) target = $region41
    $region40: #{tpu_custom_call.1} parent=1 // pred_region
      %s659 = ssub.s32 384, 384
      %660 = vsyncadd [#allocation5], %s659
      %s662 = sshll.u32 [#allocation9], 4
      %s663 = int_to_ptr.vmem [resolvable:$true] %s662
      %665 = dma.vmem_to_hbm [thread:$0]  %s663, 384, %s5, [#allocation5]
    $region41: #{tpu_custom_call.1} parent=1 // pred_fallthru
      _
    // Predicated region
    $region42: #{tpu_custom_call.1} parent=1 // pred_check
      _
    $region43: #{tpu_custom_call.1} parent=1 // pred_check_branch
      %667 = sbr.rel (0) target = $region45
    $region44: #{tpu_custom_call.1} parent=1 // pred_region
      %668 = dma.done [#allocation5], 384
    $region45: #{tpu_custom_call.1} parent=1 // pred_fallthru
      _
    %669 = vsyncpa [#allocation4], 1
    %670 = vsyncpa [#allocation7], 1
    %671 = vsyncpa [#allocation5], 1

</llo_original>
